<compile_context>
chip_gen: v6e
topology: v6e:2x2x1
jax: 0.10.0
libtpu: 0.0.40
codegen_flags: <defaults>
</compile_context>

<pallas_src>
import jax
import jax.numpy as jnp
from jax.experimental import pallas as pl
from jax.experimental.pallas import tpu as pltpu


def _round_up(x, m):
    return ((x + m - 1) // m) * m


def logreg_kernel(x_ref, w_ref, b_ref, probas_ref, logits_ref):
    # x_ref:   (TB, F)  native floating dtype batch tile (streamed)
    # w_ref:   (F, C)   f32, resident across the whole grid (constant index_map)
    # b_ref:   (1, C)   f32, resident
    # outputs: probas (TB, C) f32, logits (TB, C) f32  -- true shapes, no padding
    x = x_ref[...].astype(jnp.float32)          # matches torch's x.float()
    logits = jnp.dot(x, w_ref[...], preferred_element_type=jnp.float32)
    logits = logits + b_ref[...]
    logits_ref[...] = logits
    probas_ref[...] = jax.nn.sigmoid(logits)


def _vmem_params():
    """Generation-aware VMEM working-set budget and scoped limit.

    v5e/v6e: 128 MiB physical -> ~99 MiB budget / ~109 MiB limit.
    v7x:      64 MiB physical -> ~44 MiB budget / ~54 MiB limit.
    """
    try:
        cap = int(pltpu.get_tpu_info().vmem_capacity_bytes)
    except Exception:
        cap = 64 << 20  # conservative fallback: v7x-sized VMEM
    limit = min(int(cap * 0.85), cap - (8 << 20))
    budget = max(limit - (10 << 20), limit // 2)
    return budget, limit


def _choose_batch_tile(num_features, num_classes, x_itemsize, budget_bytes):
    """Largest batch tile (multiple of 8) whose pipelined footprint fits budget."""
    # Streamed per-row cost: x tile (native dtype) + two f32 outputs, each
    # double-buffered by the BlockSpec pipeline.
    row_bytes = 2 * num_features * x_itemsize + 2 * 2 * num_classes * 4
    # Resident W and b still get the default 2 buffers each -> count both.
    resident_bytes = 2 * (num_features * num_classes * 4 + num_classes * 4)
    avail = max(budget_bytes - resident_bytes, 8 * row_bytes)
    tb = (avail // row_bytes) // 8 * 8
    return int(max(8, min(tb, 2048)))   # 512-2048 is the measured sweet spot


def logreg_forward(x, weight, bias):
    """
    x:      (B, F)   any dtype; floating dtypes stay native and are upcast
                     inside the kernel (exact for bf16/f16 -> f32)
    weight: (C, F)   torch nn.Linear layout
    bias:   (C,)
    returns (probas, logits), both float32 of shape (B, C)
    """
    if not jnp.issubdtype(x.dtype, jnp.floating):
        x = x.astype(jnp.float32)
    B, F = x.shape
    C = weight.shape[0]

    # NOTE: for large F, store the parameter pre-transposed (F, C) / pre-cast
    # at init time so this transpose is not launched per call; it is tiny here.
    w_t = weight.astype(jnp.float32).T          # (F, C)
    b = bias.astype(jnp.float32).reshape(1, C)  # (1, C)

    budget, vmem_limit = _vmem_params()
    tb = _choose_batch_tile(F, C, x.dtype.itemsize, budget)
    tb = min(tb, _round_up(B, 8))                    # don't over-tile tiny batches
    tb = min(tb, max(8, _round_up(-(-B // 2), 8)))   # >=2 grid steps when possible (v7x megacore)

    grid = (pl.cdiv(B, tb),)                         # ragged last tile handled by Pallas

    cost = pl.CostEstimate(
        flops=2 * B * F * C,
        transcendentals=B * C,                       # sigmoid
        bytes_accessed=(B * F * x.dtype.itemsize     # x read
                        + F * C * 4 + C * 4          # W, b read
                        + 2 * B * C * 4),            # probas + logits write
    )

    out_shapes = (
        jax.ShapeDtypeStruct((B, C), jnp.float32),   # probas
        jax.ShapeDtypeStruct((B, C), jnp.float32),   # logits
    )

    probas, logits = pl.pallas_call(
        logreg_kernel,
        out_shape=out_shapes,
        grid_spec=pltpu.PrefetchScalarGridSpec(
            num_scalar_prefetch=0,
            grid=grid,
            in_specs=[
                pl.BlockSpec((tb, F), lambda i: (i, 0)),  # x: streamed per batch tile
                pl.BlockSpec((F, C), lambda i: (0, 0)),   # W: resident, full-dim block
                pl.BlockSpec((1, C), lambda i: (0, 0)),   # b: resident
            ],
            out_specs=[
                pl.BlockSpec((tb, C), lambda i: (i, 0)),
                pl.BlockSpec((tb, C), lambda i: (i, 0)),
            ],
        ),
        compiler_params=pltpu.CompilerParams(
            dimension_semantics=("parallel",),       # batch tiles are independent
            vmem_limit_bytes=int(vmem_limit),
        ),
        cost_estimate=cost,
    )(x, w_t, b)

    return probas, logits


def init_logreg_params(key, num_features, num_classes):
    """Deterministic init mirroring torch.nn.Linear default (uniform +-1/sqrt(fan_in))."""
    k_w, k_b = jax.random.split(key)
    bound = 1.0 / jnp.sqrt(jnp.float32(num_features))
    weight = jax.random.uniform(
        k_w, (num_classes, num_features), jnp.float32, -bound, bound
    )
    bias = jax.random.uniform(k_b, (num_classes,), jnp.float32, -bound, bound)
    return weight, bias


if __name__ == "__main__":
    key = jax.random.PRNGKey(0)
    k_x, k_p = jax.random.split(key)

    batch = 8
    num_features = 32
    num_classes = 8

    x = jax.random.normal(k_x, (batch, num_features), jnp.float32)
    weight, bias = init_logreg_params(k_p, num_features, num_classes)

    probas, logits = logreg_forward(x, weight, bias)
    jax.block_until_ready((probas, logits))

    # correctness check against plain JAX reference
    ref_logits = x @ weight.T + bias
    ref_probas = jax.nn.sigmoid(ref_logits)
    assert probas.shape == (batch, num_classes)
    assert logits.shape == (batch, num_classes)
    assert probas.dtype == jnp.float32 and logits.dtype == jnp.float32
    assert jnp.allclose(logits, ref_logits, atol=1e-5, rtol=1e-5)
    assert jnp.allclose(probas, ref_probas, atol=1e-5, rtol=1e-5)

    print("KERNEL_OK")
</pallas_src>

<mosaic_0001>
module attributes {stable_mosaic.version = 11 : i64} {
  func.func @logreg_kernel(%arg0: i32, %arg1: memref<8x32xf32, #tpu.memory_space<vmem>>, %arg2: memref<32x8xf32, #tpu.memory_space<vmem>>, %arg3: memref<1x8xf32, #tpu.memory_space<vmem>>, %arg4: memref<8x8xf32, #tpu.memory_space<vmem>>, %arg5: memref<8x8xf32, #tpu.memory_space<vmem>>) attributes {dimension_semantics = [#tpu.dimension_semantics<parallel>], iteration_bounds = array<i64: 1>, scalar_prefetch = 0 : i64, scratch_operands = 0 : i64, tpu.core_type = #tpu.core_type<tc>, window_params = [{transform_indices = @transform_0, window_bounds = array<i64: 8, 32>}, {pipeline_mode = #tpu.pipeline_mode<synchronous>, transform_indices = @transform_1, window_bounds = array<i64: 32, 8>}, {pipeline_mode = #tpu.pipeline_mode<synchronous>, transform_indices = @transform_2, window_bounds = array<i64: 1, 8>}, {transform_indices = @transform_3, window_bounds = array<i64: 8, 8>}, {transform_indices = @transform_4, window_bounds = array<i64: 8, 8>}]} {
    %c0 = arith.constant 0 : index
    %c0_0 = arith.constant 0 : index
    %0 = vector.load %arg1[%c0, %c0_0] : memref<8x32xf32, #tpu.memory_space<vmem>>, vector<8x32xf32>
    %c0_1 = arith.constant 0 : index
    %c0_2 = arith.constant 0 : index
    %1 = vector.load %arg2[%c0_1, %c0_2] : memref<32x8xf32, #tpu.memory_space<vmem>>, vector<32x8xf32>
    %cst = arith.constant dense<0.000000e+00> : vector<8x8xf32>
    %2 = tpu.matmul %0, %1, %cst {dimension_numbers = #tpu.dot_dimension_numbers<[1], [0], [0], [1], [0, 0, 1, 1], [], []>} : vector<8x32xf32>, vector<32x8xf32>, vector<8x8xf32> -> vector<8x8xf32>
    %c0_3 = arith.constant 0 : index
    %c0_4 = arith.constant 0 : index
    %3 = vector.load %arg3[%c0_3, %c0_4] : memref<1x8xf32, #tpu.memory_space<vmem>>, vector<1x8xf32>
    %4 = vector.broadcast %3 : vector<1x8xf32> to vector<8x8xf32>
    %5 = arith.addf %2, %4 : vector<8x8xf32>
    %c0_5 = arith.constant 0 : index
    %c0_6 = arith.constant 0 : index
    %6 = vector.load %arg5[%c0_5, %c0_6] : memref<8x8xf32, #tpu.memory_space<vmem>>, vector<8x8xf32>
    tpu.vector_store %arg5[%c0_5, %c0_6], %5 {strides = array<i32>} : memref<8x8xf32, #tpu.memory_space<vmem>>, vector<8x8xf32>,
    %7 = arith.negf %5 : vector<8x8xf32>
    %8 = math.exp %7 : vector<8x8xf32>
    %cst_7 = arith.constant 1.000000e+00 : f32
    %9 = vector.broadcast %cst_7 : f32 to vector<8x8xf32>
    %10 = arith.addf %9, %8 : vector<8x8xf32>
    %11 = arith.divf %9, %10 : vector<8x8xf32>
    %c0_8 = arith.constant 0 : index
    %c0_9 = arith.constant 0 : index
    %12 = vector.load %arg4[%c0_8, %c0_9] : memref<8x8xf32, #tpu.memory_space<vmem>>, vector<8x8xf32>
    tpu.vector_store %arg4[%c0_8, %c0_9], %11 {strides = array<i32>} : memref<8x8xf32, #tpu.memory_space<vmem>>, vector<8x8xf32>,
    return
  }
  func.func @transform_0(%arg0: i32) -> (i32, i32) {
    %c0_i32 = arith.constant 0 : i32
    %c0_i32_0 = arith.constant 0 : i32
    return %arg0, %c0_i32 : i32, i32
  }
  func.func @transform_1(%arg0: i32) -> (i32, i32) {
    %c0_i32 = arith.constant 0 : i32
    %c0_i32_0 = arith.constant 0 : i32
    %c0_i32_1 = arith.constant 0 : i32
    return %c0_i32, %c0_i32_0 : i32, i32
  }
  func.func @transform_2(%arg0: i32) -> (i32, i32) {
    %c0_i32 = arith.constant 0 : i32
    %c0_i32_0 = arith.constant 0 : i32
    %c0_i32_1 = arith.constant 0 : i32
    return %c0_i32, %c0_i32_0 : i32, i32
  }
  func.func @transform_3(%arg0: i32) -> (i32, i32) {
    %c0_i32 = arith.constant 0 : i32
    %c0_i32_0 = arith.constant 0 : i32
    return %arg0, %c0_i32 : i32, i32
  }
  func.func @transform_4(%arg0: i32) -> (i32, i32) {
    %c0_i32 = arith.constant 0 : i32
    %c0_i32_0 = arith.constant 0 : i32
    return %arg0, %c0_i32 : i32, i32
  }
}

</mosaic_0001>

<llo_original>
// kernel: tpu_custom_call.1
$region0: #{tpu_custom_call.1}
  #allocation0 [shape = 'u32[]', space=smem, size = 0x4, offset = 0x4, fixed_abs, tag = 'smem constant byte address 0x4 - core index']
  #allocation1 [shape = 'u32[144,128]{1,0:T(1,128)}', space=vmem, size = 0x12000, scoped, tag = 'internal scratch']
  %s0 = inlined_call_operand.vmem [shape: f32[8,32], index: 0, kind: input, shape index: {}]
  %s1 = inlined_call_operand.vmem [shape: f32[32,8], index: 1, kind: input, shape index: {}]
  %s2 = inlined_call_operand.vmem [shape: f32[1,8], index: 2, kind: input, shape index: {}]
  %s3 = inlined_call_operand.hbm [shape: f32[8,8], index: 3, kind: output, shape index: {0}]
  %s4 = inlined_call_operand.hbm [shape: f32[8,8], index: 4, kind: output, shape index: {1}]
  %5 = xla_tuple %s3, %s4
  %s6 = sld [smem:[#allocation0]]
  $region30: #{tpu_custom_call.1} parent=0
    _
  %s8 = ssub.s32 1, %s6
  %s9 = scalar_select 0, %s8, %s6
  $region1: #{tpu_custom_call.1} parent=0
    #allocation2 [shape = 'u8[4096]{0}', space=vmem, size = 0x1000, scoped, tag = 'output window, operand 0, single buffered']
    #allocation3 [shape = 's32[1]{0}', space=sflag, size = 0x4, scoped, tag = 'scoped memory for tpu_custom_call.1']
    #allocation4 [shape = 'u8[4096]{0}', space=vmem, size = 0x1000, scoped, tag = 'output window, operand 1, single buffered']
    #allocation5 [shape = 's32[1]{0}', space=sflag, size = 0x4, scoped, tag = 'scoped memory for tpu_custom_call.1']
    %10 = vsyncpa [#allocation3], 0
    %11 = vsyncpa [#allocation5], 0
    // Predicated region
    $region2: #{tpu_custom_call.1} parent=1 // pred_check
      _
    $region3: #{tpu_custom_call.1} parent=1 // pred_check_branch
      %13 = sbr.rel (0) target = $region5
    $region4: #{tpu_custom_call.1} parent=1 // pred_region
      _
    $region5: #{tpu_custom_call.1} parent=1 // pred_fallthru
      _
    // Predicated region
    $region6: #{tpu_custom_call.1} parent=1 // pred_check
      _
    $region7: #{tpu_custom_call.1} parent=1 // pred_check_branch
      %15 = sbr.rel (0) target = $region9
    $region8: #{tpu_custom_call.1} parent=1 // pred_region
      _
    $region9: #{tpu_custom_call.1} parent=1 // pred_fallthru
      _
    // Predicated region
    $region10: #{tpu_custom_call.1} parent=1 // pred_check
      _
    $region11: #{tpu_custom_call.1} parent=1 // pred_check_branch
      %17 = sbr.rel (0) target = $region13
    $region12: #{tpu_custom_call.1} parent=1 // pred_region
      _
    $region13: #{tpu_custom_call.1} parent=1 // pred_fallthru
      _
    %v18 = vld [vmem:[%s0] sm:$0xff]
    %v19 = vld [vmem:[%s1] sm:$0xff]
    %v20 = vld [vmem:[%s1 + $0x8] sm:$0xff]
    %v21 = vld [vmem:[%s1 + $0x10] sm:$0xff]
    %v22 = vld [vmem:[%s1 + $0x18] sm:$0xff]
    %v23 = vld [vmem:[%s2] sm:$0x1]
    %v25 = vlaneseq
    %v26 = vshrl.u32 %v25, 7
    %v27 = vsub.s32 0, %v26
    %v28 = vrot.slane %v23, %v27
    %vm30 = vcmask 261120
    %v32 = vsel %vm30, %v18, 0
    %34 = vmatprep.subr.mxu0 0.0
    %35 = vmatpush1.msra.mxu0 0.0
    %36 = vmatprep.subr.mxu0 0.0
    %37 = vmatpush1.msra.mxu0 0.0
    %38 = vmatprep.subr.mxu0 0.0
    %39 = vmatpush1.msra.mxu0 0.0
    %40 = vmatprep.subr.mxu0 0.0
    %41 = vmatpush1.msra.mxu0 0.0
    %42 = vmatprep.subr.mxu0 0.0
    %43 = vmatpush1.msra.mxu0 0.0
    %44 = vmatprep.subr.mxu0 0.0
    %45 = vmatpush1.msra.mxu0 0.0
    %46 = vmatprep.subr.mxu0 0.0
    %47 = vmatpush1.msra.mxu0 0.0
    %48 = vmatprep.subr.mxu0 0.0
    %49 = vmatpush1.msra.mxu0 0.0
    %50 = vmatprep.subr.mxu0 0.0
    %51 = vmatpush1.msra.mxu0 0.0
    %52 = vmatprep.subr.mxu0 0.0
    %53 = vmatpush1.msra.mxu0 0.0
    %54 = vmatprep.subr.mxu0 0.0
    %55 = vmatpush1.msra.mxu0 0.0
    %56 = vmatprep.subr.mxu0 0.0
    %57 = vmatpush1.msra.mxu0 0.0
    %58 = vmatprep.subr.mxu0 0.0
    %59 = vmatpush1.msra.mxu0 %v22
    %60 = vmatprep.subr.mxu0 0.0
    %61 = vmatpush1.msra.mxu0 %v21
    %62 = vmatprep.subr.mxu0 0.0
    %63 = vmatpush1.msra.mxu0 %v20
    %64 = vmatprep.subr.mxu0 0.0
    %65 = vmatpush1.msra.mxu0 %v19
    %66 = vmatprep.subr.mxu0 0.0
    %67 = vmatpush2.msra.mxu0 0.0
    %68 = vmatprep.subr.mxu0 0.0
    %69 = vmatpush2.msra.mxu0 0.0
    %70 = vmatprep.subr.mxu0 0.0
    %71 = vmatpush2.msra.mxu0 0.0
    %72 = vmatprep.subr.mxu0 0.0
    %73 = vmatpush2.msra.mxu0 0.0
    %74 = vmatprep.subr.mxu0 0.0
    %75 = vmatpush2.msra.mxu0 0.0
    %76 = vmatprep.subr.mxu0 0.0
    %77 = vmatpush2.msra.mxu0 0.0
    %78 = vmatprep.subr.mxu0 0.0
    %79 = vmatpush2.msra.mxu0 0.0
    %80 = vmatprep.subr.mxu0 0.0
    %81 = vmatpush2.msra.mxu0 0.0
    %82 = vmatprep.subr.mxu0 0.0
    %83 = vmatpush2.msra.mxu0 0.0
    %84 = vmatprep.subr.mxu0 0.0
    %85 = vmatpush2.msra.mxu0 0.0
    %86 = vmatprep.subr.mxu0 0.0
    %87 = vmatpush2.msra.mxu0 0.0
    %88 = vmatprep.subr.mxu0 0.0
    %89 = vmatpush2.msra.mxu0 0.0
    %90 = vmatprep.subr.mxu0 0.0
    %91 = vmatpush2.msra.mxu0 0.0
    %92 = vmatprep.subr.mxu0 0.0
    %93 = vmatpush2.msra.mxu0 0.0
    %94 = vmatprep.subr.mxu0 0.0
    %95 = vmatpush2.msra.mxu0 0.0
    %96 = vmatprep.subr.mxu0 0.0
    %97 = vmatpush2.msra.mxu0 0.0
    %98 = vmatprep.mubr.f32.mxu0 0.0
    %99 = vmatmul.mubr.f32.gmra.mxu0 %v32
    %v100 = vpop.f32.mrf.mxu0
    %v101 = vadd.f32 %v28, %v100
    %v102 = vpop.f32.mrf.mxu0
    %103 = vdwg.mxu0
    %vm104 = vcmask 64512
    %105 = vst.msk [vmem:[#allocation4] sm:$0xff] %vm104, %v101
    %v106 = vxor.u32 %v101, 2147483648
    %v107 = vmul.f32 %v106, 1.442695
    %v108 = vpow.pop %v107
    %v109 = vadd.f32 %v108, 1.0
    %v110 = vrcp.pop %v109
    %v111 = vmul.f32 1.0, %v110
    %112 = vst.msk [vmem:[#allocation2] sm:$0xff] %vm104, %v111
    // Predicated region
    $region14: #{tpu_custom_call.1} parent=1 // pred_check
      _
    $region15: #{tpu_custom_call.1} parent=1 // pred_check_branch
      %114 = sbr.rel (0) target = $region17
    $region16: #{tpu_custom_call.1} parent=1 // pred_region
      %s116 = ssub.s32 128, 128
      %117 = vsyncadd [#allocation3], %s116
      %s119 = sshll.u32 [#allocation2], 4
      %s120 = int_to_ptr.vmem [resolvable:$true] %s119
      %122 = dma.vmem_to_hbm [thread:$0]  %s120, 128, %s3, [#allocation3]
    $region17: #{tpu_custom_call.1} parent=1 // pred_fallthru
      _
    // Predicated region
    $region18: #{tpu_custom_call.1} parent=1 // pred_check
      _
    $region19: #{tpu_custom_call.1} parent=1 // pred_check_branch
      %124 = sbr.rel (0) target = $region21
    $region20: #{tpu_custom_call.1} parent=1 // pred_region
      %s126 = ssub.s32 128, 128
      %127 = vsyncadd [#allocation5], %s126
      %s129 = sshll.u32 [#allocation4], 4
      %s130 = int_to_ptr.vmem [resolvable:$true] %s129
      %132 = dma.vmem_to_hbm [thread:$0]  %s130, 128, %s4, [#allocation5]
    $region21: #{tpu_custom_call.1} parent=1 // pred_fallthru
      _
    // Predicated region
    $region22: #{tpu_custom_call.1} parent=1 // pred_check
      _
    $region23: #{tpu_custom_call.1} parent=1 // pred_check_branch
      %134 = sbr.rel (0) target = $region25
    $region24: #{tpu_custom_call.1} parent=1 // pred_region
      %135 = dma.done [#allocation3], 128
    $region25: #{tpu_custom_call.1} parent=1 // pred_fallthru
      _
    // Predicated region
    $region26: #{tpu_custom_call.1} parent=1 // pred_check
      _
    $region27: #{tpu_custom_call.1} parent=1 // pred_check_branch
      %137 = sbr.rel (0) target = $region29
    $region28: #{tpu_custom_call.1} parent=1 // pred_region
      %138 = dma.done [#allocation5], 128
    $region29: #{tpu_custom_call.1} parent=1 // pred_fallthru
      _
    %139 = vsyncpa [#allocation3], 1
    %140 = vsyncpa [#allocation5], 1

</llo_original>
